<compile_context>
chip_gen: v7x
topology: tpu7x:2x2x1
jax: 0.10.0
libtpu: 0.0.40
codegen_flags: <defaults>
</compile_context>

<pallas_src>
import functools

import numpy as np

import jax
import jax.numpy as jnp
from jax import lax
from jax.experimental import pallas as pl
from jax.experimental.pallas import tpu as pltpu

_EPS = 1e-5


def _round_up(x, m):
    return (x + m - 1) // m * m


# ---------------------------------------------------------------------------
# Fused Pallas kernel
# ---------------------------------------------------------------------------
def _residual_block_kernel(W, has_proj, compute_dtype, *refs):
    """One grid step processes NB images packed on the lane axis.

    In-kernel layout: activations are (C, L) with channels on sublanes and
    L = NB*H*W flattened batch*spatial on the 128-lane axis.
    """
    if has_proj:
        (x_ref, masks_ref, w1_ref, b1_ref, w2_ref, b2_ref, ws_ref, bs_ref,
         out_ref, k1_ref, k2_ref) = refs
    else:
        (x_ref, masks_ref, w1_ref, b1_ref, w2_ref, b2_ref,
         out_ref, k1_ref, k2_ref) = refs

    x = x_ref[...]                                   # (Cin_p, L)
    L = x.shape[1]

    # Hoist the 8 border masks; loaded once per grid step, reused by both convs.
    masks = [None if t == 4 else masks_ref[t] for t in range(9)]   # (1, L)

    def build_taps(a, k_ref):
        """im2col: write the 9 masked/rolled taps of `a` (C, L) into k_ref as
        a stacked-K (9*C, L) operand so the whole conv is ONE MXU matmul."""
        C = a.shape[0]
        for kh in range(3):
            for kw in range(3):
                t = kh * 3 + kw
                d = (kh - 1) * W + (kw - 1)
                if d == 0:
                    k_ref[pl.ds(t * C, C), :] = a
                else:
                    # XLU lane rotation brings the (dh, dw) neighbour into
                    # place; the 0/1 mask implements the conv zero padding and
                    # also kills cross-image / circular wrap on the packed axis.
                    k_ref[pl.ds(t * C, C), :] = (
                        pltpu.roll(a, (-d) % L, 1) * masks[t])
        return k_ref[...]

    # Shortcut branch: 1x1 conv (BN scale pre-folded into ws) or identity.
    if has_proj:
        res = jnp.dot(ws_ref[...], x, preferred_element_type=jnp.float32)
        res = res + bs_ref[...]
    else:
        res = x.astype(jnp.float32)

    # conv1 (+BN1 scale folded into w1) + bias + ReLU:
    #   one (Cout, 9*Cin) @ (9*Cin, L) MXU matmul.
    y = jnp.dot(w1_ref[...], build_taps(x, k1_ref),
                preferred_element_type=jnp.float32)
    y = jnp.maximum(y + b1_ref[...], 0.0)

    # conv2 (+BN2 scale folded into w2) + bias + shortcut + ReLU:
    #   one (Cout, 9*Cout) @ (9*Cout, L) MXU matmul.
    z = jnp.dot(w2_ref[...], build_taps(y.astype(compute_dtype), k2_ref),
                preferred_element_type=jnp.float32)
    out_ref[...] = jnp.maximum(z + b2_ref[...] + res, 0.0).astype(out_ref.dtype)


# ---------------------------------------------------------------------------
# Host-side helpers
# ---------------------------------------------------------------------------
def _fold_bn(gamma, beta, mean, var, conv_bias, eps=_EPS):
    scale = gamma / jnp.sqrt(var + eps)
    bias = beta + (conv_bias - mean) * scale
    return scale, bias


def _border_masks(H, W):
    """masks[kh*3+kw, 0, p] = 1.0 iff the (kh-1, kw-1) neighbour of flattened
    position p lies inside the HxW image (implements zero padding)."""
    pos = np.arange(H * W)
    row, col = pos // W, pos % W
    ms = []
    for dh in (-1, 0, 1):
        for dw in (-1, 0, 1):
            ok = np.ones(H * W, dtype=bool)
            if dh < 0:
                ok &= row >= -dh
            if dh > 0:
                ok &= row < H - dh
            if dw < 0:
                ok &= col >= -dw
            if dw > 0:
                ok &= col < W - dw
            ms.append(ok)
    return np.stack(ms).astype(np.float32).reshape(9, 1, H * W)


def residual_block_forward(x_nchw, p, *, compute_dtype=jnp.float32,
                           out_dtype=None, block_n=8):
    """Fused Pallas ResidualBlock forward.  Input/output are NCHW (PyTorch)."""
    N, Cin, H, W = x_nchw.shape
    Cout = p["w1"].shape[0]
    HW = H * W
    if out_dtype is None:
        out_dtype = compute_dtype
    has_proj = "w_s" in p

    # Channel padding to sublane multiples keeps every stacked-K slice
    # tile-aligned (free at real ResNet widths).
    Cin_p, Cout_p = _round_up(Cin, 8), _round_up(Cout, 8)

    # Keep >= 2 grid steps when possible so megacore / v7x's two TensorCores
    # both get work on the "parallel" batch axis; on v5e/v6e a larger NB only
    # amortises the ~0.35 us/step overhead.
    NB = max(1, min(block_n, pl.cdiv(N, 2)))
    n_blocks = pl.cdiv(N, NB)
    Np = n_blocks * NB
    L = NB * HW                      # lane extent per block (multiple of 128)

    # (N, C, H, W) -> (Cin_p, Np*H*W): channels on sublanes, batch*spatial on
    # the lane axis so each conv is one wide matmul per grid step and stores
    # are lane-dense.  (Wrapper-side transpose is layout plumbing.)
    x = x_nchw.astype(compute_dtype)
    x = jnp.pad(x, ((0, Np - N), (0, Cin_p - Cin), (0, 0), (0, 0)))
    x = jnp.transpose(x, (1, 0, 2, 3)).reshape(Cin_p, Np * HW)

    # Border masks, tiled across the NB images packed on the lane axis.
    masks = jnp.asarray(np.tile(_border_masks(H, W), (1, 1, NB)),
                        dtype=compute_dtype)                        # (9,1,L)

    s1, b1 = _fold_bn(*p["bn1"], p["b1"])
    s2, b2 = _fold_bn(*p["bn2"], p["b2"])

    def prep_w3x3(w_oihw, scale, ci_p):
        """OIHW -> (Cout_p, 9*ci_p) with the BN scale folded into the rows;
        column order (kh*3+kw)*ci_p + i matches the in-kernel tap stacking."""
        co, ci = w_oihw.shape[:2]
        w = w_oihw * scale[:, None, None, None]
        w = jnp.pad(w, ((0, Cout_p - co), (0, ci_p - ci), (0, 0), (0, 0)))
        return (jnp.transpose(w, (0, 2, 3, 1))
                .reshape(Cout_p, 9 * ci_p).astype(compute_dtype))

    def prep_bias(bias):
        return (jnp.pad(bias, (0, Cout_p - Cout))
                .reshape(Cout_p, 1).astype(jnp.float32))

    w1 = prep_w3x3(p["w1"], s1, Cin_p)
    w2 = prep_w3x3(p["w2"], s2, Cout_p)
    b1v, b2v = prep_bias(b1), prep_bias(b2)

    args = [x, masks, w1, b1v, w2, b2v]
    in_specs = [
        pl.BlockSpec((Cin_p, L), lambda n: (0, n)),
        pl.BlockSpec((9, 1, L), lambda n: (0, 0, 0)),
        pl.BlockSpec((Cout_p, 9 * Cin_p), lambda n: (0, 0)),
        pl.BlockSpec((Cout_p, 1), lambda n: (0, 0)),
        pl.BlockSpec((Cout_p, 9 * Cout_p), lambda n: (0, 0)),
        pl.BlockSpec((Cout_p, 1), lambda n: (0, 0)),
    ]
    if has_proj:
        ss, bs = _fold_bn(*p["bn_s"], p["b_s"])
        ws = jnp.pad(p["w_s"] * ss[:, None],
                     ((0, Cout_p - Cout), (0, Cin_p - Cin))).astype(compute_dtype)
        args += [ws, prep_bias(bs)]
        in_specs += [pl.BlockSpec((Cout_p, Cin_p), lambda n: (0, 0)),
                     pl.BlockSpec((Cout_p, 1), lambda n: (0, 0))]

    kernel = functools.partial(_residual_block_kernel, W, has_proj,
                               compute_dtype)

    # VMEM budget: double-buffered in/out blocks + constants + im2col scratch
    # + f32 temporaries, with margin; clamped to 64 MiB (valid on v5e/v6e/v7x).
    itm_c = np.dtype(compute_dtype).itemsize
    itm_o = np.dtype(out_dtype).itemsize
    est = (2 * Cin_p * L * itm_c                  # x block (double-buffered)
           + 2 * Cout_p * L * itm_o               # out block (double-buffered)
           + 2 * 9 * L * itm_c                    # tiled border masks
           + 9 * (Cin_p + Cout_p) * L * itm_c     # stacked-K im2col scratch
           + 4 * Cout_p * L * 4)                  # f32 y / z / res temporaries
    vmem_limit = int(min(max(2 * est, 32 * 1024 * 1024), 64 * 1024 * 1024))

    out = pl.pallas_call(
        kernel,
        out_shape=jax.ShapeDtypeStruct((Cout_p, Np * HW), out_dtype),
        grid=(n_blocks,),
        in_specs=in_specs,
        out_specs=pl.BlockSpec((Cout_p, L), lambda n: (0, n)),
        scratch_shapes=[pltpu.VMEM((9 * Cin_p, L), compute_dtype),
                        pltpu.VMEM((9 * Cout_p, L), compute_dtype)],
        compiler_params=pltpu.CompilerParams(
            dimension_semantics=("parallel",),
            vmem_limit_bytes=vmem_limit),
    )(*args)

    out = jnp.transpose(out.reshape(Cout_p, Np, H, W), (1, 0, 2, 3))
    return out[:N, :Cout]


# ---------------------------------------------------------------------------
# Parameters (PyTorch OIHW layout) & pure-JAX reference
# ---------------------------------------------------------------------------
def init_params(key, cin, cout):
    keys = jax.random.split(key, 9)

    def conv_init(kw_key, kb_key, co, ci, kh, kw):
        fan_in = ci * kh * kw
        bound = 1.0 / (fan_in ** 0.5)
        w = jax.random.uniform(kw_key, (co, ci, kh, kw), jnp.float32,
                               -bound, bound)            # OIHW
        b = jax.random.uniform(kb_key, (co,), jnp.float32, -bound, bound)
        return w, b

    def bn_init(k, c):
        k1, k2, k3, k4 = jax.random.split(k, 4)
        gamma = jax.random.uniform(k1, (c,), jnp.float32, 0.5, 1.5)
        beta = 0.1 * jax.random.normal(k2, (c,), jnp.float32)
        mean = 0.1 * jax.random.normal(k3, (c,), jnp.float32)
        var = jax.random.uniform(k4, (c,), jnp.float32, 0.5, 1.5)
        return (gamma, beta, mean, var)

    p = {}
    p["w1"], p["b1"] = conv_init(keys[0], keys[1], cout, cin, 3, 3)
    p["bn1"] = bn_init(keys[2], cout)
    p["w2"], p["b2"] = conv_init(keys[3], keys[4], cout, cout, 3, 3)
    p["bn2"] = bn_init(keys[5], cout)
    if cin != cout:
        ws, bs = conv_init(keys[6], keys[7], cout, cin, 1, 1)
        p["w_s"] = ws.reshape(cout, cin)
        p["b_s"] = bs
        p["bn_s"] = bn_init(keys[8], cout)
    return p


def ref_residual_block(x, p, eps=_EPS):
    def conv(x_, w_oihw, b, padding):
        y = lax.conv_general_dilated(
            x_, w_oihw, window_strides=(1, 1), padding=padding,
            dimension_numbers=("NCHW", "OIHW", "NCHW"))
        return y + b[None, :, None, None]

    def bn(x_, g, b, m, v):
        inv = (g / jnp.sqrt(v + eps))[None, :, None, None]
        return (x_ - m[None, :, None, None]) * inv + b[None, :, None, None]

    if "w_s" in p:
        w_s = p["w_s"][:, :, None, None]
        residual = bn(conv(x, w_s, p["b_s"], "VALID"), *p["bn_s"])
    else:
        residual = x
    out = jax.nn.relu(bn(conv(x, p["w1"], p["b1"], "SAME"), *p["bn1"]))
    out = bn(conv(out, p["w2"], p["b2"], "SAME"), *p["bn2"])
    return jax.nn.relu(out + residual)


if __name__ == "__main__":
    key = jax.random.PRNGKey(0)
    kx, kp = jax.random.split(key)
    N, Cin, Cout, H, W = 2, 4, 8, 16, 16

    x = jax.random.normal(kx, (N, Cin, H, W), jnp.float32)
    params = init_params(kp, Cin, Cout)
    ref = ref_residual_block(x, params)

    # f32 path (projection shortcut): strict check against the reference.
    out = jax.block_until_ready(residual_block_forward(x, params))
    assert out.shape == (N, Cout, H, W), out.shape
    if not bool(jnp.allclose(out, ref, rtol=1e-4, atol=1e-4)):
        err = float(jnp.max(jnp.abs(out - ref)))
        raise AssertionError(f"f32 Pallas vs reference mismatch, max err {err:e}")

    # bf16 MXU fast path (v6e/v7x), bf16 output: looser tolerance.
    out_bf16 = jax.block_until_ready(
        residual_block_forward(x, params, compute_dtype=jnp.bfloat16))
    out_bf16 = out_bf16.astype(jnp.float32)
    if not bool(jnp.allclose(out_bf16, ref, rtol=5e-2, atol=1e-1)):
        err = float(jnp.max(jnp.abs(out_bf16 - ref)))
        raise AssertionError(
            f"bf16 Pallas vs reference mismatch, max err {err:e}")

    # Identity-shortcut path (Cin == Cout), strict f32 check.
    params_id = init_params(jax.random.PRNGKey(1), Cout, Cout)
    x_id = jax.random.normal(jax.random.PRNGKey(2), (N, Cout, H, W), jnp.float32)
    ref_id = ref_residual_block(x_id, params_id)
    out_id = jax.block_until_ready(residual_block_forward(x_id, params_id))
    if not bool(jnp.allclose(out_id, ref_id, rtol=1e-4, atol=1e-4)):
        err = float(jnp.max(jnp.abs(out_id - ref_id)))
        raise AssertionError(
            f"identity-shortcut Pallas vs reference mismatch, max err {err:e}")

    print("KERNEL_OK")
</pallas_src>

<mosaic_0001>
module attributes {stable_mosaic.version = 11 : i64} {
  func.func @_residual_block_kernel(%arg0: i32, %arg1: memref<8x256xf32, #tpu.memory_space<vmem>>, %arg2: memref<9x1x256xf32, #tpu.memory_space<vmem>>, %arg3: memref<8x72xf32, #tpu.memory_space<vmem>>, %arg4: memref<8x1xf32, #tpu.memory_space<vmem>>, %arg5: memref<8x72xf32, #tpu.memory_space<vmem>>, %arg6: memref<8x1xf32, #tpu.memory_space<vmem>>, %arg7: memref<8x8xf32, #tpu.memory_space<vmem>>, %arg8: memref<8x1xf32, #tpu.memory_space<vmem>>, %arg9: memref<8x256xf32, #tpu.memory_space<vmem>>, %arg10: memref<72x256xf32, #tpu.memory_space<vmem>>, %arg11: memref<72x256xf32, #tpu.memory_space<vmem>>) attributes {dimension_semantics = [#tpu.dimension_semantics<parallel>], iteration_bounds = array<i64: 2>, scalar_prefetch = 0 : i64, scratch_operands = 2 : i64, tpu.core_type = #tpu.core_type<tc>, window_params = [{transform_indices = @transform_0, window_bounds = array<i64: 8, 256>}, {pipeline_mode = #tpu.pipeline_mode<synchronous>, transform_indices = @transform_1, window_bounds = array<i64: 9, 1, 256>}, {pipeline_mode = #tpu.pipeline_mode<synchronous>, transform_indices = @transform_2, window_bounds = array<i64: 8, 72>}, {pipeline_mode = #tpu.pipeline_mode<synchronous>, transform_indices = @transform_3, window_bounds = array<i64: 8, 1>}, {pipeline_mode = #tpu.pipeline_mode<synchronous>, transform_indices = @transform_4, window_bounds = array<i64: 8, 72>}, {pipeline_mode = #tpu.pipeline_mode<synchronous>, transform_indices = @transform_5, window_bounds = array<i64: 8, 1>}, {pipeline_mode = #tpu.pipeline_mode<synchronous>, transform_indices = @transform_6, window_bounds = array<i64: 8, 8>}, {pipeline_mode = #tpu.pipeline_mode<synchronous>, transform_indices = @transform_7, window_bounds = array<i64: 8, 1>}, {transform_indices = @transform_8, window_bounds = array<i64: 8, 256>}]} {
    %c0 = arith.constant 0 : index
    %c0_0 = arith.constant 0 : index
    %0 = vector.load %arg1[%c0, %c0_0] : memref<8x256xf32, #tpu.memory_space<vmem>>, vector<8x256xf32>
    %c0_1 = arith.constant 0 : index
    %c0_2 = arith.constant 0 : index
    %c0_3 = arith.constant 0 : index
    %1 = vector.load %arg2[%c0_1, %c0_2, %c0_3] : memref<9x1x256xf32, #tpu.memory_space<vmem>>, vector<1x1x256xf32>
    %2 = vector.shape_cast %1 : vector<1x1x256xf32> to vector<1x256xf32>
    %c1 = arith.constant 1 : index
    %c0_4 = arith.constant 0 : index
    %c0_5 = arith.constant 0 : index
    %3 = vector.load %arg2[%c1, %c0_4, %c0_5] : memref<9x1x256xf32, #tpu.memory_space<vmem>>, vector<1x1x256xf32>
    %4 = vector.shape_cast %3 : vector<1x1x256xf32> to vector<1x256xf32>
    %c2 = arith.constant 2 : index
    %c0_6 = arith.constant 0 : index
    %c0_7 = arith.constant 0 : index
    %5 = vector.load %arg2[%c2, %c0_6, %c0_7] : memref<9x1x256xf32, #tpu.memory_space<vmem>>, vector<1x1x256xf32>
    %6 = vector.shape_cast %5 : vector<1x1x256xf32> to vector<1x256xf32>
    %c3 = arith.constant 3 : index
    %c0_8 = arith.constant 0 : index
    %c0_9 = arith.constant 0 : index
    %7 = vector.load %arg2[%c3, %c0_8, %c0_9] : memref<9x1x256xf32, #tpu.memory_space<vmem>>, vector<1x1x256xf32>
    %8 = vector.shape_cast %7 : vector<1x1x256xf32> to vector<1x256xf32>
    %c5 = arith.constant 5 : index
    %c0_10 = arith.constant 0 : index
    %c0_11 = arith.constant 0 : index
    %9 = vector.load %arg2[%c5, %c0_10, %c0_11] : memref<9x1x256xf32, #tpu.memory_space<vmem>>, vector<1x1x256xf32>
    %10 = vector.shape_cast %9 : vector<1x1x256xf32> to vector<1x256xf32>
    %c6 = arith.constant 6 : index
    %c0_12 = arith.constant 0 : index
    %c0_13 = arith.constant 0 : index
    %11 = vector.load %arg2[%c6, %c0_12, %c0_13] : memref<9x1x256xf32, #tpu.memory_space<vmem>>, vector<1x1x256xf32>
    %12 = vector.shape_cast %11 : vector<1x1x256xf32> to vector<1x256xf32>
    %c7 = arith.constant 7 : index
    %c0_14 = arith.constant 0 : index
    %c0_15 = arith.constant 0 : index
    %13 = vector.load %arg2[%c7, %c0_14, %c0_15] : memref<9x1x256xf32, #tpu.memory_space<vmem>>, vector<1x1x256xf32>
    %14 = vector.shape_cast %13 : vector<1x1x256xf32> to vector<1x256xf32>
    %c8 = arith.constant 8 : index
    %c0_16 = arith.constant 0 : index
    %c0_17 = arith.constant 0 : index
    %15 = vector.load %arg2[%c8, %c0_16, %c0_17] : memref<9x1x256xf32, #tpu.memory_space<vmem>>, vector<1x1x256xf32>
    %16 = vector.shape_cast %15 : vector<1x1x256xf32> to vector<1x256xf32>
    %c0_18 = arith.constant 0 : index
    %c0_19 = arith.constant 0 : index
    %17 = vector.load %arg7[%c0_18, %c0_19] : memref<8x8xf32, #tpu.memory_space<vmem>>, vector<8x8xf32>
    %cst = arith.constant dense<0.000000e+00> : vector<8x256xf32>
    %18 = tpu.matmul %17, %0, %cst {dimension_numbers = #tpu.dot_dimension_numbers<[1], [0], [0], [1], [0, 0, 1, 1], [], []>} : vector<8x8xf32>, vector<8x256xf32>, vector<8x256xf32> -> vector<8x256xf32>
    %c0_20 = arith.constant 0 : index
    %c0_21 = arith.constant 0 : index
    %19 = vector.load %arg8[%c0_20, %c0_21] : memref<8x1xf32, #tpu.memory_space<vmem>>, vector<8x1xf32>
    %20 = vector.broadcast %19 : vector<8x1xf32> to vector<8x256xf32>
    %21 = arith.addf %18, %20 : vector<8x256xf32>
    %c0_22 = arith.constant 0 : index
    %c0_23 = arith.constant 0 : index
    %22 = vector.load %arg3[%c0_22, %c0_23] : memref<8x72xf32, #tpu.memory_space<vmem>>, vector<8x72xf32>
    %c17_i32 = arith.constant 17 : i32
    %23 = tpu.dynamic_rotate %0 by %c17_i32 dim 1 : vector<8x256xf32>, i32 -> vector<8x256xf32>
    %24 = vector.broadcast %2 : vector<1x256xf32> to vector<8x256xf32>
    %25 = arith.mulf %23, %24 : vector<8x256xf32>
    %c0_24 = arith.constant 0 : index
    %c0_25 = arith.constant 0 : index
    %26 = vector.load %arg10[%c0_24, %c0_25] : memref<72x256xf32, #tpu.memory_space<vmem>>, vector<8x256xf32>
    tpu.vector_store %arg10[%c0_24, %c0_25], %25 {strides = array<i32>} : memref<72x256xf32, #tpu.memory_space<vmem>>, vector<8x256xf32>,
    %c16_i32 = arith.constant 16 : i32
    %27 = tpu.dynamic_rotate %0 by %c16_i32 dim 1 : vector<8x256xf32>, i32 -> vector<8x256xf32>
    %28 = vector.broadcast %4 : vector<1x256xf32> to vector<8x256xf32>
    %29 = arith.mulf %27, %28 : vector<8x256xf32>
    %c8_26 = arith.constant 8 : index
    %c0_27 = arith.constant 0 : index
    %30 = vector.load %arg10[%c8_26, %c0_27] : memref<72x256xf32, #tpu.memory_space<vmem>>, vector<8x256xf32>
    tpu.vector_store %arg10[%c8_26, %c0_27], %29 {strides = array<i32>} : memref<72x256xf32, #tpu.memory_space<vmem>>, vector<8x256xf32>,
    %c15_i32 = arith.constant 15 : i32
    %31 = tpu.dynamic_rotate %0 by %c15_i32 dim 1 : vector<8x256xf32>, i32 -> vector<8x256xf32>
    %32 = vector.broadcast %6 : vector<1x256xf32> to vector<8x256xf32>
    %33 = arith.mulf %31, %32 : vector<8x256xf32>
    %c16 = arith.constant 16 : index
    %c0_28 = arith.constant 0 : index
    %34 = vector.load %arg10[%c16, %c0_28] : memref<72x256xf32, #tpu.memory_space<vmem>>, vector<8x256xf32>
    tpu.vector_store %arg10[%c16, %c0_28], %33 {strides = array<i32>} : memref<72x256xf32, #tpu.memory_space<vmem>>, vector<8x256xf32>,
    %c1_i32 = arith.constant 1 : i32
    %35 = tpu.dynamic_rotate %0 by %c1_i32 dim 1 : vector<8x256xf32>, i32 -> vector<8x256xf32>
    %36 = vector.broadcast %8 : vector<1x256xf32> to vector<8x256xf32>
    %37 = arith.mulf %35, %36 : vector<8x256xf32>
    %c24 = arith.constant 24 : index
    %c0_29 = arith.constant 0 : index
    %38 = vector.load %arg10[%c24, %c0_29] : memref<72x256xf32, #tpu.memory_space<vmem>>, vector<8x256xf32>
    tpu.vector_store %arg10[%c24, %c0_29], %37 {strides = array<i32>} : memref<72x256xf32, #tpu.memory_space<vmem>>, vector<8x256xf32>,
    %c32 = arith.constant 32 : index
    %c0_30 = arith.constant 0 : index
    %39 = vector.load %arg10[%c32, %c0_30] : memref<72x256xf32, #tpu.memory_space<vmem>>, vector<8x256xf32>
    tpu.vector_store %arg10[%c32, %c0_30], %0 {strides = array<i32>} : memref<72x256xf32, #tpu.memory_space<vmem>>, vector<8x256xf32>,
    %c255_i32 = arith.constant 255 : i32
    %40 = tpu.dynamic_rotate %0 by %c255_i32 dim 1 : vector<8x256xf32>, i32 -> vector<8x256xf32>
    %41 = vector.broadcast %10 : vector<1x256xf32> to vector<8x256xf32>
    %42 = arith.mulf %40, %41 : vector<8x256xf32>
    %c40 = arith.constant 40 : index
    %c0_31 = arith.constant 0 : index
    %43 = vector.load %arg10[%c40, %c0_31] : memref<72x256xf32, #tpu.memory_space<vmem>>, vector<8x256xf32>
    tpu.vector_store %arg10[%c40, %c0_31], %42 {strides = array<i32>} : memref<72x256xf32, #tpu.memory_space<vmem>>, vector<8x256xf32>,
    %c241_i32 = arith.constant 241 : i32
    %44 = tpu.dynamic_rotate %0 by %c241_i32 dim 1 : vector<8x256xf32>, i32 -> vector<8x256xf32>
    %45 = vector.broadcast %12 : vector<1x256xf32> to vector<8x256xf32>
    %46 = arith.mulf %44, %45 : vector<8x256xf32>
    %c48 = arith.constant 48 : index
    %c0_32 = arith.constant 0 : index
    %47 = vector.load %arg10[%c48, %c0_32] : memref<72x256xf32, #tpu.memory_space<vmem>>, vector<8x256xf32>
    tpu.vector_store %arg10[%c48, %c0_32], %46 {strides = array<i32>} : memref<72x256xf32, #tpu.memory_space<vmem>>, vector<8x256xf32>,
    %c240_i32 = arith.constant 240 : i32
    %48 = tpu.dynamic_rotate %0 by %c240_i32 dim 1 : vector<8x256xf32>, i32 -> vector<8x256xf32>
    %49 = vector.broadcast %14 : vector<1x256xf32> to vector<8x256xf32>
    %50 = arith.mulf %48, %49 : vector<8x256xf32>
    %c56 = arith.constant 56 : index
    %c0_33 = arith.constant 0 : index
    %51 = vector.load %arg10[%c56, %c0_33] : memref<72x256xf32, #tpu.memory_space<vmem>>, vector<8x256xf32>
    tpu.vector_store %arg10[%c56, %c0_33], %50 {strides = array<i32>} : memref<72x256xf32, #tpu.memory_space<vmem>>, vector<8x256xf32>,
    %c239_i32 = arith.constant 239 : i32
    %52 = tpu.dynamic_rotate %0 by %c239_i32 dim 1 : vector<8x256xf32>, i32 -> vector<8x256xf32>
    %53 = vector.broadcast %16 : vector<1x256xf32> to vector<8x256xf32>
    %54 = arith.mulf %52, %53 : vector<8x256xf32>
    %c64 = arith.constant 64 : index
    %c0_34 = arith.constant 0 : index
    %55 = vector.load %arg10[%c64, %c0_34] : memref<72x256xf32, #tpu.memory_space<vmem>>, vector<8x256xf32>
    tpu.vector_store %arg10[%c64, %c0_34], %54 {strides = array<i32>} : memref<72x256xf32, #tpu.memory_space<vmem>>, vector<8x256xf32>,
    %c0_35 = arith.constant 0 : index
    %c0_36 = arith.constant 0 : index
    %56 = vector.load %arg10[%c0_35, %c0_36] : memref<72x256xf32, #tpu.memory_space<vmem>>, vector<72x256xf32>
    %cst_37 = arith.constant dense<0.000000e+00> : vector<8x256xf32>
    %57 = tpu.matmul %22, %56, %cst_37 {dimension_numbers = #tpu.dot_dimension_numbers<[1], [0], [0], [1], [0, 0, 1, 1], [], []>} : vector<8x72xf32>, vector<72x256xf32>, vector<8x256xf32> -> vector<8x256xf32>
    %c0_38 = arith.constant 0 : index
    %c0_39 = arith.constant 0 : index
    %58 = vector.load %arg4[%c0_38, %c0_39] : memref<8x1xf32, #tpu.memory_space<vmem>>, vector<8x1xf32>
    %59 = vector.broadcast %58 : vector<8x1xf32> to vector<8x256xf32>
    %60 = arith.addf %57, %59 : vector<8x256xf32>
    %cst_40 = arith.constant 0.000000e+00 : f32
    %61 = vector.broadcast %cst_40 : f32 to vector<8x256xf32>
    %62 = arith.maximumf %60, %61 : vector<8x256xf32>
    %c0_41 = arith.constant 0 : index
    %c0_42 = arith.constant 0 : index
    %63 = vector.load %arg5[%c0_41, %c0_42] : memref<8x72xf32, #tpu.memory_space<vmem>>, vector<8x72xf32>
    %c17_i32_43 = arith.constant 17 : i32
    %64 = tpu.dynamic_rotate %62 by %c17_i32_43 dim 1 : vector<8x256xf32>, i32 -> vector<8x256xf32>
    %65 = vector.broadcast %2 : vector<1x256xf32> to vector<8x256xf32>
    %66 = arith.mulf %64, %65 : vector<8x256xf32>
    %c0_44 = arith.constant 0 : index
    %c0_45 = arith.constant 0 : index
    %67 = vector.load %arg11[%c0_44, %c0_45] : memref<72x256xf32, #tpu.memory_space<vmem>>, vector<8x256xf32>
    tpu.vector_store %arg11[%c0_44, %c0_45], %66 {strides = array<i32>} : memref<72x256xf32, #tpu.memory_space<vmem>>, vector<8x256xf32>,
    %c16_i32_46 = arith.constant 16 : i32
    %68 = tpu.dynamic_rotate %62 by %c16_i32_46 dim 1 : vector<8x256xf32>, i32 -> vector<8x256xf32>
    %69 = vector.broadcast %4 : vector<1x256xf32> to vector<8x256xf32>
    %70 = arith.mulf %68, %69 : vector<8x256xf32>
    %c8_47 = arith.constant 8 : index
    %c0_48 = arith.constant 0 : index
    %71 = vector.load %arg11[%c8_47, %c0_48] : memref<72x256xf32, #tpu.memory_space<vmem>>, vector<8x256xf32>
    tpu.vector_store %arg11[%c8_47, %c0_48], %70 {strides = array<i32>} : memref<72x256xf32, #tpu.memory_space<vmem>>, vector<8x256xf32>,
    %c15_i32_49 = arith.constant 15 : i32
    %72 = tpu.dynamic_rotate %62 by %c15_i32_49 dim 1 : vector<8x256xf32>, i32 -> vector<8x256xf32>
    %73 = vector.broadcast %6 : vector<1x256xf32> to vector<8x256xf32>
    %74 = arith.mulf %72, %73 : vector<8x256xf32>
    %c16_50 = arith.constant 16 : index
    %c0_51 = arith.constant 0 : index
    %75 = vector.load %arg11[%c16_50, %c0_51] : memref<72x256xf32, #tpu.memory_space<vmem>>, vector<8x256xf32>
    tpu.vector_store %arg11[%c16_50, %c0_51], %74 {strides = array<i32>} : memref<72x256xf32, #tpu.memory_space<vmem>>, vector<8x256xf32>,
    %c1_i32_52 = arith.constant 1 : i32
    %76 = tpu.dynamic_rotate %62 by %c1_i32_52 dim 1 : vector<8x256xf32>, i32 -> vector<8x256xf32>
    %77 = vector.broadcast %8 : vector<1x256xf32> to vector<8x256xf32>
    %78 = arith.mulf %76, %77 : vector<8x256xf32>
    %c24_53 = arith.constant 24 : index
    %c0_54 = arith.constant 0 : index
    %79 = vector.load %arg11[%c24_53, %c0_54] : memref<72x256xf32, #tpu.memory_space<vmem>>, vector<8x256xf32>
    tpu.vector_store %arg11[%c24_53, %c0_54], %78 {strides = array<i32>} : memref<72x256xf32, #tpu.memory_space<vmem>>, vector<8x256xf32>,
    %c32_55 = arith.constant 32 : index
    %c0_56 = arith.constant 0 : index
    %80 = vector.load %arg11[%c32_55, %c0_56] : memref<72x256xf32, #tpu.memory_space<vmem>>, vector<8x256xf32>
    tpu.vector_store %arg11[%c32_55, %c0_56], %62 {strides = array<i32>} : memref<72x256xf32, #tpu.memory_space<vmem>>, vector<8x256xf32>,
    %c255_i32_57 = arith.constant 255 : i32
    %81 = tpu.dynamic_rotate %62 by %c255_i32_57 dim 1 : vector<8x256xf32>, i32 -> vector<8x256xf32>
    %82 = vector.broadcast %10 : vector<1x256xf32> to vector<8x256xf32>
    %83 = arith.mulf %81, %82 : vector<8x256xf32>
    %c40_58 = arith.constant 40 : index
    %c0_59 = arith.constant 0 : index
    %84 = vector.load %arg11[%c40_58, %c0_59] : memref<72x256xf32, #tpu.memory_space<vmem>>, vector<8x256xf32>
    tpu.vector_store %arg11[%c40_58, %c0_59], %83 {strides = array<i32>} : memref<72x256xf32, #tpu.memory_space<vmem>>, vector<8x256xf32>,
    %c241_i32_60 = arith.constant 241 : i32
    %85 = tpu.dynamic_rotate %62 by %c241_i32_60 dim 1 : vector<8x256xf32>, i32 -> vector<8x256xf32>
    %86 = vector.broadcast %12 : vector<1x256xf32> to vector<8x256xf32>
    %87 = arith.mulf %85, %86 : vector<8x256xf32>
    %c48_61 = arith.constant 48 : index
    %c0_62 = arith.constant 0 : index
    %88 = vector.load %arg11[%c48_61, %c0_62] : memref<72x256xf32, #tpu.memory_space<vmem>>, vector<8x256xf32>
    tpu.vector_store %arg11[%c48_61, %c0_62], %87 {strides = array<i32>} : memref<72x256xf32, #tpu.memory_space<vmem>>, vector<8x256xf32>,
    %c240_i32_63 = arith.constant 240 : i32
    %89 = tpu.dynamic_rotate %62 by %c240_i32_63 dim 1 : vector<8x256xf32>, i32 -> vector<8x256xf32>
    %90 = vector.broadcast %14 : vector<1x256xf32> to vector<8x256xf32>
    %91 = arith.mulf %89, %90 : vector<8x256xf32>
    %c56_64 = arith.constant 56 : index
    %c0_65 = arith.constant 0 : index
    %92 = vector.load %arg11[%c56_64, %c0_65] : memref<72x256xf32, #tpu.memory_space<vmem>>, vector<8x256xf32>
    tpu.vector_store %arg11[%c56_64, %c0_65], %91 {strides = array<i32>} : memref<72x256xf32, #tpu.memory_space<vmem>>, vector<8x256xf32>,
    %c239_i32_66 = arith.constant 239 : i32
    %93 = tpu.dynamic_rotate %62 by %c239_i32_66 dim 1 : vector<8x256xf32>, i32 -> vector<8x256xf32>
    %94 = vector.broadcast %16 : vector<1x256xf32> to vector<8x256xf32>
    %95 = arith.mulf %93, %94 : vector<8x256xf32>
    %c64_67 = arith.constant 64 : index
    %c0_68 = arith.constant 0 : index
    %96 = vector.load %arg11[%c64_67, %c0_68] : memref<72x256xf32, #tpu.memory_space<vmem>>, vector<8x256xf32>
    tpu.vector_store %arg11[%c64_67, %c0_68], %95 {strides = array<i32>} : memref<72x256xf32, #tpu.memory_space<vmem>>, vector<8x256xf32>,
    %c0_69 = arith.constant 0 : index
    %c0_70 = arith.constant 0 : index
    %97 = vector.load %arg11[%c0_69, %c0_70] : memref<72x256xf32, #tpu.memory_space<vmem>>, vector<72x256xf32>
    %cst_71 = arith.constant dense<0.000000e+00> : vector<8x256xf32>
    %98 = tpu.matmul %63, %97, %cst_71 {dimension_numbers = #tpu.dot_dimension_numbers<[1], [0], [0], [1], [0, 0, 1, 1], [], []>} : vector<8x72xf32>, vector<72x256xf32>, vector<8x256xf32> -> vector<8x256xf32>
    %c0_72 = arith.constant 0 : index
    %c0_73 = arith.constant 0 : index
    %99 = vector.load %arg6[%c0_72, %c0_73] : memref<8x1xf32, #tpu.memory_space<vmem>>, vector<8x1xf32>
    %100 = vector.broadcast %99 : vector<8x1xf32> to vector<8x256xf32>
    %101 = arith.addf %98, %100 : vector<8x256xf32>
    %102 = arith.addf %101, %21 : vector<8x256xf32>
    %cst_74 = arith.constant 0.000000e+00 : f32
    %103 = vector.broadcast %cst_74 : f32 to vector<8x256xf32>
    %104 = arith.maximumf %102, %103 : vector<8x256xf32>
    %c0_75 = arith.constant 0 : index
    %c0_76 = arith.constant 0 : index
    %105 = vector.load %arg9[%c0_75, %c0_76] : memref<8x256xf32, #tpu.memory_space<vmem>>, vector<8x256xf32>
    tpu.vector_store %arg9[%c0_75, %c0_76], %104 {strides = array<i32>} : memref<8x256xf32, #tpu.memory_space<vmem>>, vector<8x256xf32>,
    return
  }
  func.func @transform_0(%arg0: i32) -> (i32, i32) {
    %c0_i32 = arith.constant 0 : i32
    %c0_i32_0 = arith.constant 0 : i32
    return %c0_i32, %arg0 : i32, i32
  }
  func.func @transform_1(%arg0: i32) -> (i32, i32, i32) {
    %c0_i32 = arith.constant 0 : i32
    %c0_i32_0 = arith.constant 0 : i32
    %c0_i32_1 = arith.constant 0 : i32
    %c0_i32_2 = arith.constant 0 : i32
    return %c0_i32, %c0_i32_0, %c0_i32_1 : i32, i32, i32
  }
  func.func @transform_2(%arg0: i32) -> (i32, i32) {
    %c0_i32 = arith.constant 0 : i32
    %c0_i32_0 = arith.constant 0 : i32
    %c0_i32_1 = arith.constant 0 : i32
    return %c0_i32, %c0_i32_0 : i32, i32
  }
  func.func @transform_3(%arg0: i32) -> (i32, i32) {
    %c0_i32 = arith.constant 0 : i32
    %c0_i32_0 = arith.constant 0 : i32
    %c0_i32_1 = arith.constant 0 : i32
    return %c0_i32, %c0_i32_0 : i32, i32
  }
  func.func @transform_4(%arg0: i32) -> (i32, i32) {
    %c0_i32 = arith.constant 0 : i32
    %c0_i32_0 = arith.constant 0 : i32
    %c0_i32_1 = arith.constant 0 : i32
    return %c0_i32, %c0_i32_0 : i32, i32
  }
  func.func @transform_5(%arg0: i32) -> (i32, i32) {
    %c0_i32 = arith.constant 0 : i32
    %c0_i32_0 = arith.constant 0 : i32
    %c0_i32_1 = arith.constant 0 : i32
    return %c0_i32, %c0_i32_0 : i32, i32
  }
  func.func @transform_6(%arg0: i32) -> (i32, i32) {
    %c0_i32 = arith.constant 0 : i32
    %c0_i32_0 = arith.constant 0 : i32
    %c0_i32_1 = arith.constant 0 : i32
    return %c0_i32, %c0_i32_0 : i32, i32
  }
  func.func @transform_7(%arg0: i32) -> (i32, i32) {
    %c0_i32 = arith.constant 0 : i32
    %c0_i32_0 = arith.constant 0 : i32
    %c0_i32_1 = arith.constant 0 : i32
    return %c0_i32, %c0_i32_0 : i32, i32
  }
  func.func @transform_8(%arg0: i32) -> (i32, i32) {
    %c0_i32 = arith.constant 0 : i32
    %c0_i32_0 = arith.constant 0 : i32
    return %c0_i32, %arg0 : i32, i32
  }
}

</mosaic_0001>

<llo_original>
// kernel: tpu_custom_call.1
$region0: #{tpu_custom_call.1}
  #allocation0 [shape = 'u32[]', space=smem, size = 0x4, offset = 0x4, fixed_abs, tag = 'smem constant byte address 0x4 - core index']
  #allocation1 [shape = 'u32[144,128]{1,0:T(1,128)}', space=vmem, size = 0x12000, scoped, tag = 'internal scratch']
  #allocation2 [shape = 'f32[72,256]{1,0:T(8,128)}', space=vmem, size = 0x12000, scoped, tag = 'scratch operand']
  #allocation3 [shape = 'f32[72,256]{1,0:T(8,128)}', space=vmem, size = 0x12000, scoped, tag = 'scratch operand']
  %s0 = inlined_call_operand.hbm [shape: f32[8,512], index: 0, kind: input, shape index: {}]
  %s1 = inlined_call_operand.vmem [shape: f32[9,1,256], index: 1, kind: input, shape index: {}]
  %s2 = inlined_call_operand.vmem [shape: f32[8,72], index: 2, kind: input, shape index: {}]
  %s3 = inlined_call_operand.vmem [shape: f32[8,1], index: 3, kind: input, shape index: {}]
  %s4 = inlined_call_operand.vmem [shape: f32[8,72], index: 4, kind: input, shape index: {}]
  %s5 = inlined_call_operand.vmem [shape: f32[8,1], index: 5, kind: input, shape index: {}]
  %s6 = inlined_call_operand.vmem [shape: f32[8,8], index: 6, kind: input, shape index: {}]
  %s7 = inlined_call_operand.vmem [shape: f32[8,1], index: 7, kind: input, shape index: {}]
  %s8 = inlined_call_operand.hbm [shape: f32[8,512], index: 8, kind: output, shape index: {}]
  %s9 = sld [smem:[#allocation0]]
  $region69: #{tpu_custom_call.1} parent=0
    _
  %s11 = ssub.s32 1, %s9
  %s12 = scalar_select 0, %s11, %s9
  $region1: #{tpu_custom_call.1} parent=0
    #allocation4 [shape = 'u8[16384]{0}', space=vmem, size = 0x4000, scoped, tag = 'input window, operand 0']
    #allocation5 [shape = 's32[2]{0}', space=sflag, size = 0x8, scoped, tag = 'scoped memory for tpu_custom_call.1']
    #allocation6 [shape = 's32[2]{0}', space=sflag, size = 0x8, scoped, tag = 'scoped memory for tpu_custom_call.1']
    #allocation7 [shape = 'u8[16384]{0}', space=vmem, size = 0x4000, scoped, tag = 'output window, operand 0']
    %13 = vsyncpa [#allocation5], 0
    %s14 = scalar_lea.sflag [#allocation5], 1
    %15 = vsyncpa %s14, 0
    %16 = vsyncpa [#allocation6], 0
    %s17 = scalar_lea.sflag [#allocation6], 1
    %18 = vsyncpa %s17, 0
    loop: start=0, step=1, limit=4
    $region2: #{tpu_custom_call.1} parent=1 // loop_pre_header
      _
    $region3: #{tpu_custom_call.1} parent=1 // loop_header
      %s20 = sphi 0, %s24
      %p21 = scmp.ge.s32.totalorder %s20, 4
      %s30 = sphi 0, %s32
      %s33 = sphi 0, %s30
      %s34 = sphi 0, %s33
      %s50 = sphi 0, %s34
      %s54 = sphi 0, %s54
      %s56 = sphi 0, %s54
      %s57 = sphi 0, %s56
      %s71 = sphi 0, %s57
      %s75 = sphi 0, %s75
      %s77 = sphi 0, %s75
      %s78 = sphi 0, %s77
      %s92 = sphi 0, %s78
      %s96 = sphi 0, %s96
      %s98 = sphi 0, %s96
      %s99 = sphi 0, %s98
      %s113 = sphi 0, %s99
      %s117 = sphi 0, %s117
      %s119 = sphi 0, %s117
      %s120 = sphi 0, %s119
      %s134 = sphi 0, %s120
      %s138 = sphi 0, %s138
      %s140 = sphi 0, %s138
      %s141 = sphi 0, %s140
      %s155 = sphi 0, %s141
      %s159 = sphi 0, %s159
      %s161 = sphi 0, %s159
      %s162 = sphi 0, %s161
      %s176 = sphi 0, %s162
      %s180 = sphi 0, %s180
      %s182 = sphi 0, %s180
      %s183 = sphi 0, %s182
      %s197 = sphi 0, %s183
      %s203 = sphi 0, %s205
      %s206 = sphi 0, %s203
      %s207 = sphi 0, %s206
      %s223 = sphi 0, %s207
    $region4: #{tpu_custom_call.1} parent=1 // loop_header_branch
      %23 = sbr.rel (%p21) target = $region8
    $region5: #{tpu_custom_call.1} parent=1 // loop_body
      %s25 = ssub.s32 %s20, 1
      %s26 = ssub.s32 %s20, 2
      %s27 = sadd.s32 %s20, 1
      %s28 = ssub.s32 %s20, %s27
      %p29 = scmp.eq.s32.totalorder %s28, 0
      %s31 = sadd.s32 %s30, 1
      %s32 = scalar_select %p29, %s30, %s31
      %p35 = pneg %p29
      %p36 = scmp.eq.s32.totalorder %s20, 1
      %p37 = por %p35, %p36
      %p38 = scmp.ne.s32.totalorder %s30, %s33
      %p39 = scmp.eq.s32.totalorder %s20, 0
      %p40 = por %p38, %p39
      %p41 = scmp.ne.s32.totalorder %s30, %s33
      %p42 = scmp.eq.s32.totalorder %s25, 1
      %p43 = por %p41, %p42
      %p44 = scmp.ne.s32.totalorder %s33, %s34
      %p45 = scmp.eq.s32.totalorder %s25, 0
      %p46 = por %p44, %p45
      %p47 = scmp.ne.s32.totalorder %s33, %s34
      %p48 = scmp.eq.s32.totalorder %s26, 1
      %p49 = por %p47, %p48
      %p51 = scmp.ne.s32.totalorder %s34, %s50
      %p52 = scmp.eq.s32.totalorder %s26, 0
      %p53 = por %p51, %p52
      %s55 = sadd.s32 %s54, 1
      %p58 = scmp.eq.s32.totalorder %s20, 1
      %p59 = scmp.ne.s32.totalorder %s54, %s56
      %p60 = scmp.eq.s32.totalorder %s20, 0
      %p61 = por %p59, %p60
      %p62 = scmp.ne.s32.totalorder %s54, %s56
      %p63 = scmp.eq.s32.totalorder %s25, 1
      %p64 = por %p62, %p63
      %p65 = scmp.ne.s32.totalorder %s56, %s57
      %p66 = scmp.eq.s32.totalorder %s25, 0
      %p67 = por %p65, %p66
      %p68 = scmp.ne.s32.totalorder %s56, %s57
      %p69 = scmp.eq.s32.totalorder %s26, 1
      %p70 = por %p68, %p69
      %p72 = scmp.ne.s32.totalorder %s57, %s71
      %p73 = scmp.eq.s32.totalorder %s26, 0
      %p74 = por %p72, %p73
      %s76 = sadd.s32 %s75, 1
      %p79 = scmp.eq.s32.totalorder %s20, 1
      %p80 = scmp.ne.s32.totalorder %s75, %s77
      %p81 = scmp.eq.s32.totalorder %s20, 0
      %p82 = por %p80, %p81
      %p83 = scmp.ne.s32.totalorder %s75, %s77
      %p84 = scmp.eq.s32.totalorder %s25, 1
      %p85 = por %p83, %p84
      %p86 = scmp.ne.s32.totalorder %s77, %s78
      %p87 = scmp.eq.s32.totalorder %s25, 0
      %p88 = por %p86, %p87
      %p89 = scmp.ne.s32.totalorder %s77, %s78
      %p90 = scmp.eq.s32.totalorder %s26, 1
      %p91 = por %p89, %p90
      %p93 = scmp.ne.s32.totalorder %s78, %s92
      %p94 = scmp.eq.s32.totalorder %s26, 0
      %p95 = por %p93, %p94
      %s97 = sadd.s32 %s96, 1
      %p100 = scmp.eq.s32.totalorder %s20, 1
      %p101 = scmp.ne.s32.totalorder %s96, %s98
      %p102 = scmp.eq.s32.totalorder %s20, 0
      %p103 = por %p101, %p102
      %p104 = scmp.ne.s32.totalorder %s96, %s98
      %p105 = scmp.eq.s32.totalorder %s25, 1
      %p106 = por %p104, %p105
      %p107 = scmp.ne.s32.totalorder %s98, %s99
      %p108 = scmp.eq.s32.totalorder %s25, 0
      %p109 = por %p107, %p108
      %p110 = scmp.ne.s32.totalorder %s98, %s99
      %p111 = scmp.eq.s32.totalorder %s26, 1
      %p112 = por %p110, %p111
      %p114 = scmp.ne.s32.totalorder %s99, %s113
      %p115 = scmp.eq.s32.totalorder %s26, 0
      %p116 = por %p114, %p115
      %s118 = sadd.s32 %s117, 1
      %p121 = scmp.eq.s32.totalorder %s20, 1
      %p122 = scmp.ne.s32.totalorder %s117, %s119
      %p123 = scmp.eq.s32.totalorder %s20, 0
      %p124 = por %p122, %p123
      %p125 = scmp.ne.s32.totalorder %s117, %s119
      %p126 = scmp.eq.s32.totalorder %s25, 1
      %p127 = por %p125, %p126
      %p128 = scmp.ne.s32.totalorder %s119, %s120
      %p129 = scmp.eq.s32.totalorder %s25, 0
      %p130 = por %p128, %p129
      %p131 = scmp.ne.s32.totalorder %s119, %s120
      %p132 = scmp.eq.s32.totalorder %s26, 1
      %p133 = por %p131, %p132
      %p135 = scmp.ne.s32.totalorder %s120, %s134
      %p136 = scmp.eq.s32.totalorder %s26, 0
      %p137 = por %p135, %p136
      %s139 = sadd.s32 %s138, 1
      %p142 = scmp.eq.s32.totalorder %s20, 1
      %p143 = scmp.ne.s32.totalorder %s138, %s140
      %p144 = scmp.eq.s32.totalorder %s20, 0
      %p145 = por %p143, %p144
      %p146 = scmp.ne.s32.totalorder %s138, %s140
      %p147 = scmp.eq.s32.totalorder %s25, 1
      %p148 = por %p146, %p147
      %p149 = scmp.ne.s32.totalorder %s140, %s141
      %p150 = scmp.eq.s32.totalorder %s25, 0
      %p151 = por %p149, %p150
      %p152 = scmp.ne.s32.totalorder %s140, %s141
      %p153 = scmp.eq.s32.totalorder %s26, 1
      %p154 = por %p152, %p153
      %p156 = scmp.ne.s32.totalorder %s141, %s155
      %p157 = scmp.eq.s32.totalorder %s26, 0
      %p158 = por %p156, %p157
      %s160 = sadd.s32 %s159, 1
      %p163 = scmp.eq.s32.totalorder %s20, 1
      %p164 = scmp.ne.s32.totalorder %s159, %s161
      %p165 = scmp.eq.s32.totalorder %s20, 0
      %p166 = por %p164, %p165
      %p167 = scmp.ne.s32.totalorder %s159, %s161
      %p168 = scmp.eq.s32.totalorder %s25, 1
      %p169 = por %p167, %p168
      %p170 = scmp.ne.s32.totalorder %s161, %s162
      %p171 = scmp.eq.s32.totalorder %s25, 0
      %p172 = por %p170, %p171
      %p173 = scmp.ne.s32.totalorder %s161, %s162
      %p174 = scmp.eq.s32.totalorder %s26, 1
      %p175 = por %p173, %p174
      %p177 = scmp.ne.s32.totalorder %s162, %s176
      %p178 = scmp.eq.s32.totalorder %s26, 0
      %p179 = por %p177, %p178
      %s181 = sadd.s32 %s180, 1
      %p184 = scmp.eq.s32.totalorder %s20, 1
      %p185 = scmp.ne.s32.totalorder %s180, %s182
      %p186 = scmp.eq.s32.totalorder %s20, 0
      %p187 = por %p185, %p186
      %p188 = scmp.ne.s32.totalorder %s180, %s182
      %p189 = scmp.eq.s32.totalorder %s25, 1
      %p190 = por %p188, %p189
      %p191 = scmp.ne.s32.totalorder %s182, %s183
      %p192 = scmp.eq.s32.totalorder %s25, 0
      %p193 = por %p191, %p192
      %p194 = scmp.ne.s32.totalorder %s182, %s183
      %p195 = scmp.eq.s32.totalorder %s26, 1
      %p196 = por %p194, %p195
      %p198 = scmp.ne.s32.totalorder %s183, %s197
      %p199 = scmp.eq.s32.totalorder %s26, 0
      %p200 = por %p198, %p199
      %s201 = ssub.s32 %s20, %s27
      %p202 = scmp.eq.s32.totalorder %s201, 0
      %s204 = sadd.s32 %s203, 1
      %s205 = scalar_select %p202, %s203, %s204
      %p208 = pneg %p202
      %p209 = scmp.eq.s32.totalorder %s20, 1
      %p210 = por %p208, %p209
      %p211 = scmp.ne.s32.totalorder %s203, %s206
      %p212 = scmp.eq.s32.totalorder %s20, 0
      %p213 = por %p211, %p212
      %p214 = scmp.ne.s32.totalorder %s203, %s206
      %p215 = scmp.eq.s32.totalorder %s25, 1
      %p216 = por %p214, %p215
      %p217 = scmp.ne.s32.totalorder %s206, %s207
      %p218 = scmp.eq.s32.totalorder %s25, 0
      %p219 = por %p217, %p218
      %p220 = scmp.ne.s32.totalorder %s206, %s207
      %p221 = scmp.eq.s32.totalorder %s26, 1
      %p222 = por %p220, %p221
      %p224 = scmp.ne.s32.totalorder %s207, %s223
      %p225 = scmp.eq.s32.totalorder %s26, 0
      %p226 = por %p224, %p225
      %p227 = scmp.le.s32.totalorder 1, %s20
      %p228 = scmp.lt.s32.totalorder %s20, 3
      %p229 = pnand %p227, %p228
      %p230 = pneg %p229
      // Predicated region
      $region9: #{tpu_custom_call.1} parent=5 // pred_check
        _
      $region10: #{tpu_custom_call.1} parent=5 // pred_check_branch
        %232 = sbr.rel (%p229) target = $region12
      $region11: #{tpu_custom_call.1} parent=5 // pred_region
        %s233 = ssub.s32 %s20, 1
        // Predicated region
        $region13: #{tpu_custom_call.1} parent=11 // pred_check
          %p234 = pneg %p67
        $region14: #{tpu_custom_call.1} parent=11 // pred_check_branch
          %236 = sbr.rel (%p234) target = $region16
        $region15: #{tpu_custom_call.1} parent=11 // pred_region
          _
        $region16: #{tpu_custom_call.1} parent=11 // pred_fallthru
          _
        // Predicated region
        $region17: #{tpu_custom_call.1} parent=11 // pred_check
          %p237 = pneg %p88
        $region18: #{tpu_custom_call.1} parent=11 // pred_check_branch
          %239 = sbr.rel (%p237) target = $region20
        $region19: #{tpu_custom_call.1} parent=11 // pred_region
          _
        $region20: #{tpu_custom_call.1} parent=11 // pred_fallthru
          _
        // Predicated region
        $region21: #{tpu_custom_call.1} parent=11 // pred_check
          %p240 = pneg %p109
        $region22: #{tpu_custom_call.1} parent=11 // pred_check_branch
          %242 = sbr.rel (%p240) target = $region24
        $region23: #{tpu_custom_call.1} parent=11 // pred_region
          _
        $region24: #{tpu_custom_call.1} parent=11 // pred_fallthru
          _
        // Predicated region
        $region25: #{tpu_custom_call.1} parent=11 // pred_check
          %p243 = pneg %p130
        $region26: #{tpu_custom_call.1} parent=11 // pred_check_branch
          %245 = sbr.rel (%p243) target = $region28
        $region27: #{tpu_custom_call.1} parent=11 // pred_region
          _
        $region28: #{tpu_custom_call.1} parent=11 // pred_fallthru
          _
        // Predicated region
        $region29: #{tpu_custom_call.1} parent=11 // pred_check
          %p246 = pneg %p151
        $region30: #{tpu_custom_call.1} parent=11 // pred_check_branch
          %248 = sbr.rel (%p246) target = $region32
        $region31: #{tpu_custom_call.1} parent=11 // pred_region
          _
        $region32: #{tpu_custom_call.1} parent=11 // pred_fallthru
          _
        // Predicated region
        $region33: #{tpu_custom_call.1} parent=11 // pred_check
          %p249 = pneg %p172
        $region34: #{tpu_custom_call.1} parent=11 // pred_check_branch
          %251 = sbr.rel (%p249) target = $region36
        $region35: #{tpu_custom_call.1} parent=11 // pred_region
          _
        $region36: #{tpu_custom_call.1} parent=11 // pred_fallthru
          _
        // Predicated region
        $region37: #{tpu_custom_call.1} parent=11 // pred_check
          %p252 = pneg %p193
        $region38: #{tpu_custom_call.1} parent=11 // pred_check_branch
          %254 = sbr.rel (%p252) target = $region40
        $region39: #{tpu_custom_call.1} parent=11 // pred_region
          _
        $region40: #{tpu_custom_call.1} parent=11 // pred_fallthru
          _
      $region12: #{tpu_custom_call.1} parent=5 // pred_fallthru
        _
      %p255 = scmp.lt.s32.totalorder %s20, 2
      // Predicated region
      $region41: #{tpu_custom_call.1} parent=5 // pred_check
        %p256 = pneg %p255
      $region42: #{tpu_custom_call.1} parent=5 // pred_check_branch
        %258 = sbr.rel (%p256) target = $region44
      $region43: #{tpu_custom_call.1} parent=5 // pred_region
        // Predicated region
        $region45: #{tpu_custom_call.1} parent=43 // pred_check
          %p259 = pneg %p40
        $region46: #{tpu_custom_call.1} parent=43 // pred_check_branch
          %261 = sbr.rel (%p259) target = $region48
        $region47: #{tpu_custom_call.1} parent=43 // pred_region
          %s262 = sand.u32 %s30, 1
          %s263 = scalar_lea.sflag [#allocation5], %s262
          %s264 = sand.u32 %s30, 1
          %s265 = smul.addr %s264, 16
          %s266 = scalar_lea.vmem [#allocation4], %s265
          %s267 = smul.u32 2, %s20
          %s269 = ssub.s32 256, 256
          %270 = vsyncadd %s263, %s269
          %s271 = smul.addr %s267, 128
          %s272 = scalar_lea.hbm %s0, %s271
          %s274 = sshll.u32 %s266, 4
          %s275 = int_to_ptr.vmem [resolvable:$true] %s274
          %277 = dma.hbm_to_vmem [thread:$0]  %s272, 256, %s275, %s263
        $region48: #{tpu_custom_call.1} parent=43 // pred_fallthru
          _
      $region44: #{tpu_custom_call.1} parent=5 // pred_fallthru
        _
      %p278 = scmp.le.s32.totalorder 1, %s20
      %p279 = scmp.lt.s32.totalorder %s20, 3
      %p280 = pnand %p278, %p279
      %p281 = pneg %p280
      // Predicated region
      $region49: #{tpu_custom_call.1} parent=5 // pred_check
        _
      $region50: #{tpu_custom_call.1} parent=5 // pred_check_branch
        %283 = sbr.rel (%p280) target = $region52
      $region51: #{tpu_custom_call.1} parent=5 // pred_region
        %s284 = ssub.s32 %s20, 1
        %s285 = sand.u32 %s33, 1
        %s286 = scalar_lea.sflag [#allocation5], %s285
        %s287 = sand.u32 %s33, 1
        %s288 = smul.addr %s287, 16
        %s289 = scalar_lea.vmem [#allocation4], %s288
        // Predicated region
        $region53: #{tpu_custom_call.1} parent=51 // pred_check
          %p290 = pneg %p46
        $region54: #{tpu_custom_call.1} parent=51 // pred_check_branch
          %292 = sbr.rel (%p290) target = $region56
        $region55: #{tpu_custom_call.1} parent=51 // pred_region
          %293 = dma.done %s286, 256
        $region56: #{tpu_custom_call.1} parent=51 // pred_fallthru
          _
        %s294 = sand.u32 %s33, 1
        %s295 = scalar_lea.sflag [#allocation5], %s294
        %s296 = sand.u32 %s33, 1
        %s297 = smul.addr %s296, 16
        %s298 = scalar_lea.vmem [#allocation4], %s297
        %p299 = pneg %p46
        %p300 = pneg %p43
        %p301 = pneg %p67
        %p302 = pneg %p64
        %p303 = pneg %p88
        %p304 = pneg %p85
        %p305 = pneg %p109
        %p306 = pneg %p106
        %p307 = pneg %p130
        %p308 = pneg %p127
        %p309 = pneg %p151
        %p310 = pneg %p148
        %p311 = pneg %p172
        %p312 = pneg %p169
        %p313 = pneg %p193
        %p314 = pneg %p190
        %p315 = pneg %p219
        %p316 = pneg %p216
        %s317 = sand.u32 %s206, 1
        %s318 = scalar_lea.sflag [#allocation6], %s317
        %s319 = sand.u32 %s206, 1
        %s320 = smul.addr %s319, 16
        %s321 = scalar_lea.vmem [#allocation7], %s320
        %s322 = smul.u32 2, %s25
        %s323 = smul.u32 2, %s25
        %v324 = vld [vmem:[%s289] sm:$0xff]
        %v325 = vld [vmem:[%s289 + $0x8] sm:$0xff]
        %v326 = vld [vmem:[%s1] sm:$0x3]
        %s327 = scalar_lea.vmem %s1, 2
        %v328 = vld [vmem:[%s327] sm:$0x3]
        %s329 = scalar_lea.vmem %s1, 4
        %v330 = vld [vmem:[%s329] sm:$0x3]
        %s331 = scalar_lea.vmem %s1, 6
        %v332 = vld [vmem:[%s331] sm:$0x3]
        %s333 = scalar_lea.vmem %s1, 10
        %v334 = vld [vmem:[%s333] sm:$0x3]
        %s335 = scalar_lea.vmem %s1, 12
        %v336 = vld [vmem:[%s335] sm:$0x3]
        %s337 = scalar_lea.vmem %s1, 14
        %v338 = vld [vmem:[%s337] sm:$0x3]
        %s339 = scalar_lea.vmem %s1, 16
        %v340 = vld [vmem:[%s339] sm:$0x3]
        %v341 = vld [vmem:[%s6] sm:$0xff]
        %v342 = vld [vmem:[%s7] sm:$0xff]
        %344 = vset.pattern.permute.xlu0 0
        %345 = vperm.xlu0 %344, %v342
        %v346 = vpop.permute.xlu0 %345
        %vm348 = vcmask 64512
        %v350 = vsel %vm348, %v341, 0
        %352 = vmatprep.subr.mxu0 %v325
        %353 = vmatpush1.msra.mxu0 %v324
        %354 = vmatprep.subr.mxu0 0.0
        %355 = vmatpush1.msra.mxu0 0.0
        %356 = vmatprep.subr.mxu0 0.0
        %357 = vmatpush1.msra.mxu0 0.0
        %358 = vmatprep.subr.mxu0 0.0
        %359 = vmatpush1.msra.mxu0 0.0
        %360 = vmatprep.subr.mxu0 0.0
        %361 = vmatpush1.msra.mxu0 0.0
        %362 = vmatprep.subr.mxu0 0.0
        %363 = vmatpush1.msra.mxu0 0.0
        %364 = vmatprep.subr.mxu0 0.0
        %365 = vmatpush1.msra.mxu0 0.0
        %366 = vmatprep.subr.mxu0 0.0
        %367 = vmatpush1.msra.mxu0 0.0
        %368 = vmatprep.subr.mxu0 0.0
        %369 = vmatpush1.msra.mxu0 0.0
        %370 = vmatprep.subr.mxu0 0.0
        %371 = vmatpush1.msra.mxu0 0.0
        %372 = vmatprep.subr.mxu0 0.0
        %373 = vmatpush1.msra.mxu0 0.0
        %374 = vmatprep.subr.mxu0 0.0
        %375 = vmatpush1.msra.mxu0 0.0
        %376 = vmatprep.subr.mxu0 0.0
        %377 = vmatpush1.msra.mxu0 0.0
        %378 = vmatprep.subr.mxu0 0.0
        %379 = vmatpush1.msra.mxu0 0.0
        %380 = vmatprep.subr.mxu0 0.0
        %381 = vmatpush1.msra.mxu0 0.0
        %382 = vmatprep.subr.mxu0 0.0
        %383 = vmatpush1.msra.mxu0 0.0
        %384 = vmatprep.subr.mxu0 0.0
        %385 = vmatpush1.msra.mxu0 0.0
        %386 = vmatprep.subr.mxu0 0.0
        %387 = vmatpush1.msra.mxu0 0.0
        %388 = vmatprep.subr.mxu0 0.0
        %389 = vmatpush1.msra.mxu0 0.0
        %390 = vmatprep.subr.mxu0 0.0
        %391 = vmatpush1.msra.mxu0 0.0
        %392 = vmatprep.subr.mxu0 0.0
        %393 = vmatpush1.msra.mxu0 0.0
        %394 = vmatprep.subr.mxu0 0.0
        %395 = vmatpush1.msra.mxu0 0.0
        %396 = vmatprep.subr.mxu0 0.0
        %397 = vmatpush1.msra.mxu0 0.0
        %398 = vmatprep.subr.mxu0 0.0
        %399 = vmatpush1.msra.mxu0 0.0
        %400 = vmatprep.subr.mxu0 0.0
        %401 = vmatpush1.msra.mxu0 0.0
        %402 = vmatprep.subr.mxu0 0.0
        %403 = vmatpush1.msra.mxu0 0.0
        %404 = vmatprep.subr.mxu0 0.0
        %405 = vmatpush1.msra.mxu0 0.0
        %406 = vmatprep.subr.mxu0 0.0
        %407 = vmatpush1.msra.mxu0 0.0
        %408 = vmatprep.subr.mxu0 0.0
        %409 = vmatpush1.msra.mxu0 0.0
        %410 = vmatprep.subr.mxu0 0.0
        %411 = vmatpush1.msra.mxu0 0.0
        %412 = vmatprep.subr.mxu0 0.0
        %413 = vmatpush1.msra.mxu0 0.0
        %414 = vmatprep.subr.mxu0 0.0
        %415 = vmatpush1.msra.mxu0 0.0
        %416 = vmatprep.mubr.f32.mxu0 0.0
        %417 = vmatmul.mubr.f32.gmra.mrb[0].mxu0 %v350
        %v418 = vpop.f32.mrb[0].mxu0
        %v419 = vadd.f32 %v346, %v418
        %v420 = vpop.f32.mrb[0].mxu0
        %v421 = vadd.f32 %v346, %v420
        %422 = vdwg.mxu0
        %v423 = vld [vmem:[%s2] sm:$0xff]
        %424 = vrot.lane.b32.xlu0 %v324, 17
        %v425 = vpop.permute.xlu0 %424
        %426 = vrot.lane.b32.xlu0 %v325, 17
        %v427 = vpop.permute.xlu0 %426
        %v428 = vlaneseq
        %v429 = vand.u32 %v428, 127
        %vm430 = vcmp.lt.s32.totalorder %v429, 17
        %v431 = vsel %vm430, %v425, %v427
        %v432 = vsel %vm430, %v427, %v425
        %v434 = vlaneseq
        %v435 = vshrl.u32 %v434, 7
        %v436 = vsub.s32 0, %v435
        %v437 = vrot.slane %v326, %v436
        %v438 = vlaneseq
        %v439 = vshrl.u32 %v438, 7
        %v440 = vsub.s32 1, %v439
        %v441 = vrot.slane %v326, %v440
        %v444 = vmul.f32 %v432, %v437
        %v445 = vmul.f32 %v431, %v441
        %446 = vst [vmem:[#allocation2] sm:$0xff] %v444
        %447 = vst [vmem:[#allocation2 + $0x8] sm:$0xff] %v445
        %448 = vrot.lane.b32.xlu0 %v324, 16
        %v449 = vpop.permute.xlu0 %448
        %450 = vrot.lane.b32.xlu0 %v325, 16
        %v451 = vpop.permute.xlu0 %450
        %vm452 = vcmp.lt.s32.totalorder %v429, 16
        %v453 = vsel %vm452, %v449, %v451
        %v454 = vsel %vm452, %v451, %v449
        %v456 = vlaneseq
        %v457 = vshrl.u32 %v456, 7
        %v458 = vsub.s32 0, %v457
        %v459 = vrot.slane %v328, %v458
        %v460 = vlaneseq
        %v461 = vshrl.u32 %v460, 7
        %v462 = vsub.s32 1, %v461
        %v463 = vrot.slane %v328, %v462
        %v466 = vmul.f32 %v454, %v459
        %v467 = vmul.f32 %v453, %v463
        %468 = vst [vmem:[#allocation2 + $0x10] sm:$0xff] %v466
        %469 = vst [vmem:[#allocation2 + $0x18] sm:$0xff] %v467
        %470 = vrot.lane.b32.xlu0 %v324, 15
        %v471 = vpop.permute.xlu0 %470
        %472 = vrot.lane.b32.xlu0 %v325, 15
        %v473 = vpop.permute.xlu0 %472
        %vm474 = vcmp.lt.s32.totalorder %v429, 15
        %v475 = vsel %vm474, %v471, %v473
        %v476 = vsel %vm474, %v473, %v471
        %v478 = vlaneseq
        %v479 = vshrl.u32 %v478, 7
        %v480 = vsub.s32 0, %v479
        %v481 = vrot.slane %v330, %v480
        %v482 = vlaneseq
        %v483 = vshrl.u32 %v482, 7
        %v484 = vsub.s32 1, %v483
        %v485 = vrot.slane %v330, %v484
        %v488 = vmul.f32 %v476, %v481
        %v489 = vmul.f32 %v475, %v485
        %490 = vst [vmem:[#allocation2 + $0x20] sm:$0xff] %v488
        %491 = vst [vmem:[#allocation2 + $0x28] sm:$0xff] %v489
        %492 = vrot.lane.b32.xlu0 %v324, 1
        %v493 = vpop.permute.xlu0 %492
        %494 = vrot.lane.b32.xlu0 %v325, 1
        %v495 = vpop.permute.xlu0 %494
        %vm496 = vcmp.lt.s32.totalorder %v429, 1
        %v497 = vsel %vm496, %v493, %v495
        %v498 = vsel %vm496, %v495, %v493
        %v500 = vlaneseq
        %v501 = vshrl.u32 %v500, 7
        %v502 = vsub.s32 0, %v501
        %v503 = vrot.slane %v332, %v502
        %v504 = vlaneseq
        %v505 = vshrl.u32 %v504, 7
        %v506 = vsub.s32 1, %v505
        %v507 = vrot.slane %v332, %v506
        %v510 = vmul.f32 %v498, %v503
        %v511 = vmul.f32 %v497, %v507
        %512 = vst [vmem:[#allocation2 + $0x30] sm:$0xff] %v510
        %513 = vst [vmem:[#allocation2 + $0x38] sm:$0xff] %v511
        %514 = vst [vmem:[#allocation2 + $0x40] sm:$0xff] %v324
        %515 = vst [vmem:[#allocation2 + $0x48] sm:$0xff] %v325
        %516 = vrot.lane.b32.xlu0 %v324, 127
        %v517 = vpop.permute.xlu0 %516
        %518 = vrot.lane.b32.xlu0 %v325, 127
        %v519 = vpop.permute.xlu0 %518
        %vm520 = vcmp.lt.s32.totalorder %v429, 127
        %v521 = vsel %vm520, %v517, %v519
        %v522 = vsel %vm520, %v519, %v517
        %v524 = vlaneseq
        %v525 = vshrl.u32 %v524, 7
        %v526 = vsub.s32 0, %v525
        %v527 = vrot.slane %v334, %v526
        %v528 = vlaneseq
        %v529 = vshrl.u32 %v528, 7
        %v530 = vsub.s32 1, %v529
        %v531 = vrot.slane %v334, %v530
        %v534 = vmul.f32 %v521, %v527
        %v535 = vmul.f32 %v522, %v531
        %536 = vst [vmem:[#allocation2 + $0x50] sm:$0xff] %v534
        %537 = vst [vmem:[#allocation2 + $0x58] sm:$0xff] %v535
        %538 = vrot.lane.b32.xlu0 %v324, 113
        %v539 = vpop.permute.xlu0 %538
        %540 = vrot.lane.b32.xlu0 %v325, 113
        %v541 = vpop.permute.xlu0 %540
        %vm542 = vcmp.lt.s32.totalorder %v429, 113
        %v543 = vsel %vm542, %v539, %v541
        %v544 = vsel %vm542, %v541, %v539
        %v546 = vlaneseq
        %v547 = vshrl.u32 %v546, 7
        %v548 = vsub.s32 0, %v547
        %v549 = vrot.slane %v336, %v548
        %v550 = vlaneseq
        %v551 = vshrl.u32 %v550, 7
        %v552 = vsub.s32 1, %v551
        %v553 = vrot.slane %v336, %v552
        %v556 = vmul.f32 %v543, %v549
        %v557 = vmul.f32 %v544, %v553
        %558 = vst [vmem:[#allocation2 + $0x60] sm:$0xff] %v556
        %559 = vst [vmem:[#allocation2 + $0x68] sm:$0xff] %v557
        %560 = vrot.lane.b32.xlu0 %v324, 112
        %v561 = vpop.permute.xlu0 %560
        %562 = vrot.lane.b32.xlu0 %v325, 112
        %v563 = vpop.permute.xlu0 %562
        %vm564 = vcmp.lt.s32.totalorder %v429, 112
        %v565 = vsel %vm564, %v561, %v563
        %v566 = vsel %vm564, %v563, %v561
        %v568 = vlaneseq
        %v569 = vshrl.u32 %v568, 7
        %v570 = vsub.s32 0, %v569
        %v571 = vrot.slane %v338, %v570
        %v572 = vlaneseq
        %v573 = vshrl.u32 %v572, 7
        %v574 = vsub.s32 1, %v573
        %v575 = vrot.slane %v338, %v574
        %v578 = vmul.f32 %v565, %v571
        %v579 = vmul.f32 %v566, %v575
        %580 = vst [vmem:[#allocation2 + $0x70] sm:$0xff] %v578
        %581 = vst [vmem:[#allocation2 + $0x78] sm:$0xff] %v579
        %582 = vrot.lane.b32.xlu0 %v324, 111
        %v583 = vpop.permute.xlu0 %582
        %584 = vrot.lane.b32.xlu0 %v325, 111
        %v585 = vpop.permute.xlu0 %584
        %vm586 = vcmp.lt.s32.totalorder %v429, 111
        %v587 = vsel %vm586, %v583, %v585
        %v588 = vsel %vm586, %v585, %v583
        %v590 = vlaneseq
        %v591 = vshrl.u32 %v590, 7
        %v592 = vsub.s32 0, %v591
        %v593 = vrot.slane %v340, %v592
        %v594 = vlaneseq
        %v595 = vshrl.u32 %v594, 7
        %v596 = vsub.s32 1, %v595
        %v597 = vrot.slane %v340, %v596
        %v600 = vmul.f32 %v587, %v593
        %v601 = vmul.f32 %v588, %v597
        %602 = vst [vmem:[#allocation2 + $0x80] sm:$0xff] %v600
        %603 = vst [vmem:[#allocation2 + $0x88] sm:$0xff] %v601
        %v604 = vld [vmem:[#allocation2] sm:$0xff]
        %v605 = vld [vmem:[#allocation2 + $0x8] sm:$0xff]
        %v606 = vld [vmem:[#allocation2 + $0x10] sm:$0xff]
        %v607 = vld [vmem:[#allocation2 + $0x18] sm:$0xff]
        %v608 = vld [vmem:[#allocation2 + $0x20] sm:$0xff]
        %v609 = vld [vmem:[#allocation2 + $0x28] sm:$0xff]
        %v610 = vld [vmem:[#allocation2 + $0x30] sm:$0xff]
        %v611 = vld [vmem:[#allocation2 + $0x38] sm:$0xff]
        %v612 = vld [vmem:[#allocation2 + $0x40] sm:$0xff]
        %v613 = vld [vmem:[#allocation2 + $0x48] sm:$0xff]
        %v614 = vld [vmem:[#allocation2 + $0x50] sm:$0xff]
        %v615 = vld [vmem:[#allocation2 + $0x58] sm:$0xff]
        %v616 = vld [vmem:[#allocation2 + $0x60] sm:$0xff]
        %v617 = vld [vmem:[#allocation2 + $0x68] sm:$0xff]
        %v618 = vld [vmem:[#allocation2 + $0x70] sm:$0xff]
        %v619 = vld [vmem:[#allocation2 + $0x78] sm:$0xff]
        %v620 = vld [vmem:[#allocation2 + $0x80] sm:$0xff]
        %v621 = vld [vmem:[#allocation2 + $0x88] sm:$0xff]
        %v622 = vld [vmem:[%s3] sm:$0xff]
        %624 = vset.pattern.permute.xlu0 0
        %625 = vperm.xlu0 %624, %v622
        %v626 = vpop.permute.xlu0 %625
        %vm628 = vcmask 588800
        %v630 = vsel %vm628, %v423, 0
        %632 = vmatprep.subr.mxu0 %v605
        %633 = vmatpush1.msra.mxu0 %v604
        %634 = vmatprep.subr.mxu0 %v607
        %635 = vmatpush1.msra.mxu0 %v606
        %636 = vmatprep.subr.mxu0 %v609
        %637 = vmatpush1.msra.mxu0 %v608
        %638 = vmatprep.subr.mxu0 %v611
        %639 = vmatpush1.msra.mxu0 %v610
        %640 = vmatprep.subr.mxu0 %v613
        %641 = vmatpush1.msra.mxu0 %v612
        %642 = vmatprep.subr.mxu0 %v615
        %643 = vmatpush1.msra.mxu0 %v614
        %644 = vmatprep.subr.mxu0 %v617
        %645 = vmatpush1.msra.mxu0 %v616
        %646 = vmatprep.subr.mxu0 %v619
        %647 = vmatpush1.msra.mxu0 %v618
        %648 = vmatprep.subr.mxu0 %v621
        %649 = vmatpush1.msra.mxu0 %v620
        %650 = vmatprep.subr.mxu0 0.0
        %651 = vmatpush1.msra.mxu0 0.0
        %652 = vmatprep.subr.mxu0 0.0
        %653 = vmatpush1.msra.mxu0 0.0
        %654 = vmatprep.subr.mxu0 0.0
        %655 = vmatpush1.msra.mxu0 0.0
        %656 = vmatprep.subr.mxu0 0.0
        %657 = vmatpush1.msra.mxu0 0.0
        %658 = vmatprep.subr.mxu0 0.0
        %659 = vmatpush1.msra.mxu0 0.0
        %660 = vmatprep.subr.mxu0 0.0
        %661 = vmatpush1.msra.mxu0 0.0
        %662 = vmatprep.subr.mxu0 0.0
        %663 = vmatpush1.msra.mxu0 0.0
        %664 = vmatprep.subr.mxu0 0.0
        %665 = vmatpush1.msra.mxu0 0.0
        %666 = vmatprep.subr.mxu0 0.0
        %667 = vmatpush1.msra.mxu0 0.0
        %668 = vmatprep.subr.mxu0 0.0
        %669 = vmatpush1.msra.mxu0 0.0
        %670 = vmatprep.subr.mxu0 0.0
        %671 = vmatpush1.msra.mxu0 0.0
        %672 = vmatprep.subr.mxu0 0.0
        %673 = vmatpush1.msra.mxu0 0.0
        %674 = vmatprep.subr.mxu0 0.0
        %675 = vmatpush1.msra.mxu0 0.0
        %676 = vmatprep.subr.mxu0 0.0
        %677 = vmatpush1.msra.mxu0 0.0
        %678 = vmatprep.subr.mxu0 0.0
        %679 = vmatpush1.msra.mxu0 0.0
        %680 = vmatprep.subr.mxu0 0.0
        %681 = vmatpush1.msra.mxu0 0.0
        %682 = vmatprep.subr.mxu0 0.0
        %683 = vmatpush1.msra.mxu0 0.0
        %684 = vmatprep.subr.mxu0 0.0
        %685 = vmatpush1.msra.mxu0 0.0
        %686 = vmatprep.subr.mxu0 0.0
        %687 = vmatpush1.msra.mxu0 0.0
        %688 = vmatprep.subr.mxu0 0.0
        %689 = vmatpush1.msra.mxu0 0.0
        %690 = vmatprep.subr.mxu0 0.0
        %691 = vmatpush1.msra.mxu0 0.0
        %692 = vmatprep.subr.mxu0 0.0
        %693 = vmatpush1.msra.mxu0 0.0
        %694 = vmatprep.subr.mxu0 0.0
        %695 = vmatpush1.msra.mxu0 0.0
        %696 = vmatprep.mubr.f32.mxu0 0.0
        %697 = vmatmul.mubr.f32.gmra.mrb[0].mxu0 %v630
        %v698 = vpop.f32.mrb[0].mxu0
        %v699 = vadd.f32 %v626, %v698
        %v700 = vpop.f32.mrb[0].mxu0
        %v701 = vadd.f32 %v626, %v700
        %702 = vdwg.mxu0
        %v703 = vmax.f32 %v699, 0.0
        %v704 = vmax.f32 %v701, 0.0
        %v705 = vld [vmem:[%s4] sm:$0xff]
        %706 = vrot.lane.b32.xlu0 %v703, 17
        %v707 = vpop.permute.xlu0 %706
        %708 = vrot.lane.b32.xlu0 %v704, 17
        %v709 = vpop.permute.xlu0 %708
        %v710 = vsel %vm430, %v707, %v709
        %v711 = vsel %vm430, %v709, %v707
        %v712 = vmul.f32 %v711, %v437
        %v713 = vmul.f32 %v710, %v441
        %714 = vst [vmem:[#allocation3] sm:$0xff] %v712
        %715 = vst [vmem:[#allocation3 + $0x8] sm:$0xff] %v713
        %716 = vrot.lane.b32.xlu0 %v703, 16
        %v717 = vpop.permute.xlu0 %716
        %718 = vrot.lane.b32.xlu0 %v704, 16
        %v719 = vpop.permute.xlu0 %718
        %v720 = vsel %vm452, %v717, %v719
        %v721 = vsel %vm452, %v719, %v717
        %v722 = vmul.f32 %v721, %v459
        %v723 = vmul.f32 %v720, %v463
        %724 = vst [vmem:[#allocation3 + $0x10] sm:$0xff] %v722
        %725 = vst [vmem:[#allocation3 + $0x18] sm:$0xff] %v723
        %726 = vrot.lane.b32.xlu0 %v703, 15
        %v727 = vpop.permute.xlu0 %726
        %728 = vrot.lane.b32.xlu0 %v704, 15
        %v729 = vpop.permute.xlu0 %728
        %v730 = vsel %vm474, %v727, %v729
        %v731 = vsel %vm474, %v729, %v727
        %v732 = vmul.f32 %v731, %v481
        %v733 = vmul.f32 %v730, %v485
        %734 = vst [vmem:[#allocation3 + $0x20] sm:$0xff] %v732
        %735 = vst [vmem:[#allocation3 + $0x28] sm:$0xff] %v733
        %736 = vrot.lane.b32.xlu0 %v703, 1
        %v737 = vpop.permute.xlu0 %736
        %738 = vrot.lane.b32.xlu0 %v704, 1
        %v739 = vpop.permute.xlu0 %738
        %v740 = vsel %vm496, %v737, %v739
        %v741 = vsel %vm496, %v739, %v737
        %v742 = vmul.f32 %v741, %v503
        %v743 = vmul.f32 %v740, %v507
        %744 = vst [vmem:[#allocation3 + $0x30] sm:$0xff] %v742
        %745 = vst [vmem:[#allocation3 + $0x38] sm:$0xff] %v743
        %746 = vst [vmem:[#allocation3 + $0x40] sm:$0xff] %v703
        %747 = vst [vmem:[#allocation3 + $0x48] sm:$0xff] %v704
        %748 = vrot.lane.b32.xlu0 %v703, 127
        %v749 = vpop.permute.xlu0 %748
        %750 = vrot.lane.b32.xlu0 %v704, 127
        %v751 = vpop.permute.xlu0 %750
        %v752 = vsel %vm520, %v749, %v751
        %v753 = vsel %vm520, %v751, %v749
        %v754 = vmul.f32 %v752, %v527
        %v755 = vmul.f32 %v753, %v531
        %756 = vst [vmem:[#allocation3 + $0x50] sm:$0xff] %v754
        %757 = vst [vmem:[#allocation3 + $0x58] sm:$0xff] %v755
        %758 = vrot.lane.b32.xlu0 %v703, 113
        %v759 = vpop.permute.xlu0 %758
        %760 = vrot.lane.b32.xlu0 %v704, 113
        %v761 = vpop.permute.xlu0 %760
        %v762 = vsel %vm542, %v759, %v761
        %v763 = vsel %vm542, %v761, %v759
        %v764 = vmul.f32 %v762, %v549
        %v765 = vmul.f32 %v763, %v553
        %766 = vst [vmem:[#allocation3 + $0x60] sm:$0xff] %v764
        %767 = vst [vmem:[#allocation3 + $0x68] sm:$0xff] %v765
        %768 = vrot.lane.b32.xlu0 %v703, 112
        %v769 = vpop.permute.xlu0 %768
        %770 = vrot.lane.b32.xlu0 %v704, 112
        %v771 = vpop.permute.xlu0 %770
        %v772 = vsel %vm564, %v769, %v771
        %v773 = vsel %vm564, %v771, %v769
        %v774 = vmul.f32 %v772, %v571
        %v775 = vmul.f32 %v773, %v575
        %776 = vst [vmem:[#allocation3 + $0x70] sm:$0xff] %v774
        %777 = vst [vmem:[#allocation3 + $0x78] sm:$0xff] %v775
        %778 = vrot.lane.b32.xlu0 %v703, 111
        %v779 = vpop.permute.xlu0 %778
        %780 = vrot.lane.b32.xlu0 %v704, 111
        %v781 = vpop.permute.xlu0 %780
        %v782 = vsel %vm586, %v779, %v781
        %v783 = vsel %vm586, %v781, %v779
        %v784 = vmul.f32 %v782, %v593
        %v785 = vmul.f32 %v783, %v597
        %786 = vst [vmem:[#allocation3 + $0x80] sm:$0xff] %v784
        %787 = vst [vmem:[#allocation3 + $0x88] sm:$0xff] %v785
        %v788 = vld [vmem:[#allocation3] sm:$0xff]
        %v789 = vld [vmem:[#allocation3 + $0x8] sm:$0xff]
        %v790 = vld [vmem:[#allocation3 + $0x10] sm:$0xff]
        %v791 = vld [vmem:[#allocation3 + $0x18] sm:$0xff]
        %v792 = vld [vmem:[#allocation3 + $0x20] sm:$0xff]
        %v793 = vld [vmem:[#allocation3 + $0x28] sm:$0xff]
        %v794 = vld [vmem:[#allocation3 + $0x30] sm:$0xff]
        %v795 = vld [vmem:[#allocation3 + $0x38] sm:$0xff]
        %v796 = vld [vmem:[#allocation3 + $0x40] sm:$0xff]
        %v797 = vld [vmem:[#allocation3 + $0x48] sm:$0xff]
        %v798 = vld [vmem:[#allocation3 + $0x50] sm:$0xff]
        %v799 = vld [vmem:[#allocation3 + $0x58] sm:$0xff]
        %v800 = vld [vmem:[#allocation3 + $0x60] sm:$0xff]
        %v801 = vld [vmem:[#allocation3 + $0x68] sm:$0xff]
        %v802 = vld [vmem:[#allocation3 + $0x70] sm:$0xff]
        %v803 = vld [vmem:[#allocation3 + $0x78] sm:$0xff]
        %v804 = vld [vmem:[#allocation3 + $0x80] sm:$0xff]
        %v805 = vld [vmem:[#allocation3 + $0x88] sm:$0xff]
        %v806 = vld [vmem:[%s5] sm:$0xff]
        %808 = vset.pattern.permute.xlu0 0
        %809 = vperm.xlu0 %808, %v806
        %v810 = vpop.permute.xlu0 %809
        %v813 = vsel %vm628, %v705, 0
        %815 = vmatprep.subr.mxu0 %v789
        %816 = vmatpush1.msra.mxu0 %v788
        %817 = vmatprep.subr.mxu0 %v791
        %818 = vmatpush1.msra.mxu0 %v790
        %819 = vmatprep.subr.mxu0 %v793
        %820 = vmatpush1.msra.mxu0 %v792
        %821 = vmatprep.subr.mxu0 %v795
        %822 = vmatpush1.msra.mxu0 %v794
        %823 = vmatprep.subr.mxu0 %v797
        %824 = vmatpush1.msra.mxu0 %v796
        %825 = vmatprep.subr.mxu0 %v799
        %826 = vmatpush1.msra.mxu0 %v798
        %827 = vmatprep.subr.mxu0 %v801
        %828 = vmatpush1.msra.mxu0 %v800
        %829 = vmatprep.subr.mxu0 %v803
        %830 = vmatpush1.msra.mxu0 %v802
        %831 = vmatprep.subr.mxu0 %v805
        %832 = vmatpush1.msra.mxu0 %v804
        %833 = vmatprep.subr.mxu0 0.0
        %834 = vmatpush1.msra.mxu0 0.0
        %835 = vmatprep.subr.mxu0 0.0
        %836 = vmatpush1.msra.mxu0 0.0
        %837 = vmatprep.subr.mxu0 0.0
        %838 = vmatpush1.msra.mxu0 0.0
        %839 = vmatprep.subr.mxu0 0.0
        %840 = vmatpush1.msra.mxu0 0.0
        %841 = vmatprep.subr.mxu0 0.0
        %842 = vmatpush1.msra.mxu0 0.0
        %843 = vmatprep.subr.mxu0 0.0
        %844 = vmatpush1.msra.mxu0 0.0
        %845 = vmatprep.subr.mxu0 0.0
        %846 = vmatpush1.msra.mxu0 0.0
        %847 = vmatprep.subr.mxu0 0.0
        %848 = vmatpush1.msra.mxu0 0.0
        %849 = vmatprep.subr.mxu0 0.0
        %850 = vmatpush1.msra.mxu0 0.0
        %851 = vmatprep.subr.mxu0 0.0
        %852 = vmatpush1.msra.mxu0 0.0
        %853 = vmatprep.subr.mxu0 0.0
        %854 = vmatpush1.msra.mxu0 0.0
        %855 = vmatprep.subr.mxu0 0.0
        %856 = vmatpush1.msra.mxu0 0.0
        %857 = vmatprep.subr.mxu0 0.0
        %858 = vmatpush1.msra.mxu0 0.0
        %859 = vmatprep.subr.mxu0 0.0
        %860 = vmatpush1.msra.mxu0 0.0
        %861 = vmatprep.subr.mxu0 0.0
        %862 = vmatpush1.msra.mxu0 0.0
        %863 = vmatprep.subr.mxu0 0.0
        %864 = vmatpush1.msra.mxu0 0.0
        %865 = vmatprep.subr.mxu0 0.0
        %866 = vmatpush1.msra.mxu0 0.0
        %867 = vmatprep.subr.mxu0 0.0
        %868 = vmatpush1.msra.mxu0 0.0
        %869 = vmatprep.subr.mxu0 0.0
        %870 = vmatpush1.msra.mxu0 0.0
        %871 = vmatprep.subr.mxu0 0.0
        %872 = vmatpush1.msra.mxu0 0.0
        %873 = vmatprep.subr.mxu0 0.0
        %874 = vmatpush1.msra.mxu0 0.0
        %875 = vmatprep.subr.mxu0 0.0
        %876 = vmatpush1.msra.mxu0 0.0
        %877 = vmatprep.subr.mxu0 0.0
        %878 = vmatpush1.msra.mxu0 0.0
        %879 = vmatprep.mubr.f32.mxu0 0.0
        %880 = vmatmul.mubr.f32.gmra.mrb[0].mxu0 %v813
        %v881 = vpop.f32.mrb[0].mxu0
        %v882 = vadd.f32 %v810, %v881
        %v883 = vpop.f32.mrb[0].mxu0
        %v884 = vadd.f32 %v810, %v883
        %885 = vdwg.mxu0
        %v886 = vadd.f32 %v882, %v419
        %v887 = vadd.f32 %v884, %v421
        %v888 = vmax.f32 %v886, 0.0
        %v889 = vmax.f32 %v887, 0.0
        %890 = vst [vmem:[%s321] sm:$0xff] %v888
        %891 = vst [vmem:[%s321 + $0x8] sm:$0xff] %v889
        %s892 = sand.u32 %s206, 1
        %s893 = scalar_lea.sflag [#allocation6], %s892
        %s894 = sand.u32 %s206, 1
        %s895 = smul.addr %s894, 16
        %s896 = scalar_lea.vmem [#allocation7], %s895
        // Predicated region
        $region57: #{tpu_custom_call.1} parent=51 // pred_check
          %p897 = pneg %p216
        $region58: #{tpu_custom_call.1} parent=51 // pred_check_branch
          %899 = sbr.rel (%p897) target = $region60
        $region59: #{tpu_custom_call.1} parent=51 // pred_region
          %s900 = smul.u32 2, %s25
          %s902 = ssub.s32 256, 256
          %903 = vsyncadd %s893, %s902
          %s904 = smul.addr %s900, 128
          %s905 = scalar_lea.hbm %s8, %s904
          %s907 = sshll.u32 %s896, 4
          %s908 = int_to_ptr.vmem [resolvable:$true] %s907
          %910 = dma.vmem_to_hbm [thread:$0]  %s908, 256, %s905, %s893
        $region60: #{tpu_custom_call.1} parent=51 // pred_fallthru
          _
      $region52: #{tpu_custom_call.1} parent=5 // pred_fallthru
        _
      %p911 = scmp.le.s32.totalorder 2, %s20
      // Predicated region
      $region61: #{tpu_custom_call.1} parent=5 // pred_check
        %p912 = pneg %p911
      $region62: #{tpu_custom_call.1} parent=5 // pred_check_branch
        %914 = sbr.rel (%p912) target = $region64
      $region63: #{tpu_custom_call.1} parent=5 // pred_region
        %s915 = ssub.s32 %s20, 2
        // Predicated region
        $region65: #{tpu_custom_call.1} parent=63 // pred_check
          %p916 = pneg %p222
        $region66: #{tpu_custom_call.1} parent=63 // pred_check_branch
          %918 = sbr.rel (%p916) target = $region68
        $region67: #{tpu_custom_call.1} parent=63 // pred_region
          %s919 = sand.u32 %s207, 1
          %s920 = scalar_lea.sflag [#allocation6], %s919
          %s921 = sand.u32 %s207, 1
          %s922 = smul.addr %s921, 16
          %s923 = scalar_lea.vmem [#allocation7], %s922
          %924 = dma.done %s920, 256
        $region68: #{tpu_custom_call.1} parent=63 // pred_fallthru
          _
      $region64: #{tpu_custom_call.1} parent=5 // pred_fallthru
        _
    $region6: #{tpu_custom_call.1} parent=1 // loop_footer
      %s24 = sadd.s32 1, %s20
    $region7: #{tpu_custom_call.1} parent=1 // loop_footer_branch
      %19 = sbr.rel target = $region3
    $region8: #{tpu_custom_call.1} parent=1 // loop_exit
      _
    %925 = vsyncpa [#allocation5], 1
    %s926 = scalar_lea.sflag [#allocation5], 1
    %927 = vsyncpa %s926, 1
    %928 = vsyncpa [#allocation6], 1
    %s929 = scalar_lea.sflag [#allocation6], 1
    %930 = vsyncpa %s929, 1

</llo_original>
